<compile_context>
chip_gen: v6e
topology: v6e:2x2x1
jax: 0.10.0
libtpu: 0.0.40
codegen_flags: <defaults>
</compile_context>

<pallas_src>
import numpy as np
import jax
import jax.numpy as jnp
from jax.experimental import pallas as pl
from jax.experimental.pallas import tpu as pltpu


def _torgb_kernel(x_ref, w_ref, b_ref, o_ref):
    # x_ref : (C_in, T)      bf16 activation tile, HW on the lane axis
    # w_ref : (C_out, C_in)  bf16 per-sample modulated conv weight (styles folded in)
    # b_ref : (C_out, 1)     f32 output bias
    # o_ref : (C_out, T)     f32 output tile (lane-dense along HW)
    y = jnp.dot(w_ref[...], x_ref[...], preferred_element_type=jnp.float32)   # MXU, f32 acc
    o_ref[...] = jnp.clip(y + b_ref[...], -256.0, 256.0).astype(o_ref.dtype)


def _choose_hw_tile(HW, C_in, bytes_per_elem, budget_bytes=4 << 20):
    """HW tile: a multiple of 128 with one x tile (C_in*T*bytes) under ~4 MiB, so
    double-buffering fits comfortably even on v7x (64 MiB physical VMEM).  Prefers an
    exact divisor of HW; otherwise the caller uses a pl.cdiv grid and Pallas masks the
    partial last block.  HW < 128 (tiny 4x4/8x8 toRGB stages) uses a full-extent block."""
    if HW < 128:
        return HW
    cap = max(128, (budget_bytes // max(1, C_in * bytes_per_elem)) // 128 * 128)
    t = min((HW // 128) * 128, cap)
    d = t
    while d >= 128:
        if HW % d == 0:
            return d
        d -= 128
    return t  # no multiple-of-128 divisor under the cap; partial tail is masked


def torgb_layer2(x_nchw, w, affine_W, affine_b, conv_w, bias,
                 activation_dtype=jnp.bfloat16):
    """x_nchw: [N, C_in, H, W]; w: [N, w_dim]; affine_W: [C_in, w_dim];
    affine_b: [C_in]; conv_w: [C_out, C_in, 1, 1]; bias: [C_out]."""
    N, C_in, H, W = x_nchw.shape
    w_dim = w.shape[1]
    C_out, _, k, _ = conv_w.shape
    HW = H * W

    affine_gain = 1.0 / np.sqrt(w_dim)          # FullyConnectedLayer weight_gain
    weight_gain = 1.0 / np.sqrt(C_in * k * k)   # ToRGBLayer2 weight_gain

    # Tiny per-sample style precompute stays in XLA (O(N*w_dim*C_in) flops).
    w32 = w.astype(jnp.float32)
    styles = (w32 @ (affine_W.astype(jnp.float32) * affine_gain).T
              + affine_b.astype(jnp.float32)[None, :]) * weight_gain          # [N, C_in]

    # Fold modulation into a per-sample weight -> kernel is a pure MXU matmul.
    cw = conv_w[:, :, 0, 0].astype(jnp.float32)                               # [C_out, C_in]
    w_mod = (cw[None, :, :] * styles[:, None, :]).astype(activation_dtype)    # [N, C_out, C_in]

    # NCHW-native: pure (free) reshape; HBM path in bf16 to halve x traffic.
    # TODO(synk): in a fused pipeline the producer should emit bf16 directly; here the
    # cast is a separate XLA pass over x when x arrives as f32.
    x3 = x_nchw.reshape(N, C_in, HW)
    if x3.dtype != activation_dtype:
        x3 = x3.astype(activation_dtype)
    b2 = bias.reshape(C_out, 1).astype(jnp.float32)

    bpe = jnp.dtype(activation_dtype).itemsize
    T = _choose_hw_tile(HW, C_in, bpe)
    grid = (N, pl.cdiv(HW, T))

    # Explicit scoped-VMEM limit sized from the double-buffered footprint; cap keeps it
    # safe under v7x's 64 MiB physical VMEM (v5e default scoped is only 16 MiB).
    x_tile_b = C_in * T * bpe
    out_tile_b = C_out * T * 4
    w_b = C_out * C_in * bpe
    need = 2 * (x_tile_b + w_b + 4096) + 2 * out_tile_b
    vmem_limit = int(min(max(4 * need, 16 << 20), 48 << 20))

    cost = pl.CostEstimate(
        flops=2 * N * HW * C_in * C_out,
        transcendentals=0,
        bytes_accessed=(bpe * N * C_in * HW          # x (bf16)
                        + 4 * N * C_out * HW          # out (f32)
                        + bpe * N * C_out * C_in      # per-sample modulated weight
                        + 4 * C_out),                 # bias
    )

    # TODO(synk): optionally sweep pipeline_mode=pl.Buffered(3) on the x BlockSpec
    # (0-5% on DMA jitter at large T); omitted to keep VMEM headroom on v7x.
    out = pl.pallas_call(
        _torgb_kernel,
        out_shape=jax.ShapeDtypeStruct((N, C_out, HW), jnp.float32),
        grid_spec=pltpu.PrefetchScalarGridSpec(
            num_scalar_prefetch=0,
            grid=grid,
            in_specs=[
                pl.BlockSpec((None, C_in, T), lambda n, t: (n, 0, t)),      # x tile (lane-dense HW)
                pl.BlockSpec((None, C_out, C_in), lambda n, t: (n, 0, 0)),  # per-sample w_mod
                pl.BlockSpec((C_out, 1), lambda n, t: (0, 0)),              # output bias
            ],
            out_specs=pl.BlockSpec((None, C_out, T), lambda n, t: (n, 0, t)),
        ),
        compiler_params=pltpu.CompilerParams(
            dimension_semantics=("parallel", "parallel"),
            vmem_limit_bytes=vmem_limit),
        cost_estimate=cost,
    )(x3, w_mod, b2)

    # Free reshape back to NCHW.
    return out.reshape(N, C_out, H, W)


def _reference(x_nchw, w, affine_W, affine_b, conv_w, bias):
    """Faithful f32 reference for the PyTorch module."""
    N, C_in, H, W = x_nchw.shape
    w_dim = w.shape[1]
    C_out, _, k, _ = conv_w.shape
    affine_gain = 1.0 / np.sqrt(w_dim)
    weight_gain = 1.0 / np.sqrt(C_in * k * k)
    styles = (w @ (affine_W * affine_gain).T + affine_b[None, :]) * weight_gain   # [N, C_in]
    xs = x_nchw * styles[:, :, None, None]
    y = jnp.einsum('nihw,oi->nohw', xs, conv_w[:, :, 0, 0])
    return jnp.clip(y + bias[None, :, None, None], -256.0, 256.0)


def _reference_quantized(x_nchw, w, affine_W, affine_b, conv_w, bias, act_dtype):
    """Reference with the same bf16 quantization of x / modulated weight as the kernel."""
    N, C_in, H, W = x_nchw.shape
    w_dim = w.shape[1]
    C_out, _, k, _ = conv_w.shape
    affine_gain = 1.0 / np.sqrt(w_dim)
    weight_gain = 1.0 / np.sqrt(C_in * k * k)
    styles = (w @ (affine_W * affine_gain).T + affine_b[None, :]) * weight_gain
    w_mod = (conv_w[:, :, 0, 0][None, :, :] * styles[:, None, :]
             ).astype(act_dtype).astype(jnp.float32)
    xq = x_nchw.astype(act_dtype).astype(jnp.float32)
    y = jnp.einsum('noi,nihw->nohw', w_mod, xq)
    return jnp.clip(y + bias[None, :, None, None], -256.0, 256.0)


if __name__ == "__main__":
    # Small shapes consistent with the module: batch=2, in_channels=16, out_channels=4,
    # w_dim=32, spatial 16x16, kernel_size=1.
    N, C_in, C_out, w_dim, H, Wsp = 2, 16, 4, 32, 16, 16

    key = jax.random.PRNGKey(0)
    k0, k1, k2, k3 = jax.random.split(key, 4)

    x = jax.random.normal(k0, (N, C_in, H, Wsp), dtype=jnp.float32)
    w = jax.random.normal(k1, (N, w_dim), dtype=jnp.float32)
    # Parameters (deterministic, matching __init__ shapes / init semantics):
    affine_W = jax.random.normal(k2, (C_in, w_dim), dtype=jnp.float32)      # FC weight ~ randn
    affine_b = jnp.ones((C_in,), dtype=jnp.float32)                         # bias_init=1
    conv_w = jax.random.normal(k3, (C_out, C_in, 1, 1), dtype=jnp.float32)  # torch.randn
    bias = jnp.zeros((C_out,), dtype=jnp.float32)                           # torch.zeros

    out = jax.block_until_ready(torgb_layer2(x, w, affine_W, affine_b, conv_w, bias))

    # Semantics check vs. the f32 module reference (loose tolerances absorb the bf16
    # quantization of x / modulated weight on the HBM path).
    ref32 = _reference(x, w, affine_W, affine_b, conv_w, bias)
    np.testing.assert_allclose(np.asarray(out), np.asarray(ref32), rtol=3e-2, atol=3e-1)

    # Tight check vs. a reference with identical bf16 input quantization (f32 accumulation).
    refq = _reference_quantized(x, w, affine_W, affine_b, conv_w, bias, jnp.bfloat16)
    np.testing.assert_allclose(np.asarray(out), np.asarray(refq), rtol=1e-4, atol=1e-3)

    print("KERNEL_OK")
</pallas_src>

<mosaic_0001>
module attributes {stable_mosaic.version = 11 : i64} {
  func.func @_torgb_kernel(%arg0: i32, %arg1: i32, %arg2: memref<1x16x256xbf16, #tpu.memory_space<vmem>>, %arg3: memref<1x4x16xbf16, #tpu.memory_space<vmem>>, %arg4: memref<4x1xf32, #tpu.memory_space<vmem>>, %arg5: memref<1x4x256xf32, #tpu.memory_space<vmem>>) attributes {dimension_semantics = [#tpu.dimension_semantics<parallel>, #tpu.dimension_semantics<parallel>], iteration_bounds = array<i64: 2, 1>, scalar_prefetch = 0 : i64, scratch_operands = 0 : i64, tpu.core_type = #tpu.core_type<tc>, window_params = [{transform_indices = @transform_0, window_bounds = array<i64: 1, 16, 256>}, {transform_indices = @transform_1, window_bounds = array<i64: 1, 4, 16>}, {pipeline_mode = #tpu.pipeline_mode<synchronous>, transform_indices = @transform_2, window_bounds = array<i64: 4, 1>}, {transform_indices = @transform_3, window_bounds = array<i64: 1, 4, 256>}]} {
    %c0 = arith.constant 0 : index
    %c0_0 = arith.constant 0 : index
    %c0_1 = arith.constant 0 : index
    %0 = vector.load %arg3[%c0, %c0_0, %c0_1] : memref<1x4x16xbf16, #tpu.memory_space<vmem>>, vector<1x4x16xbf16>
    %1 = vector.shape_cast %0 : vector<1x4x16xbf16> to vector<4x16xbf16>
    %c0_2 = arith.constant 0 : index
    %c0_3 = arith.constant 0 : index
    %c0_4 = arith.constant 0 : index
    %2 = vector.load %arg2[%c0_2, %c0_3, %c0_4] : memref<1x16x256xbf16, #tpu.memory_space<vmem>>, vector<1x16x256xbf16>
    %3 = vector.shape_cast %2 : vector<1x16x256xbf16> to vector<16x256xbf16>
    %cst = arith.constant dense<0.000000e+00> : vector<4x256xf32>
    %4 = tpu.matmul %1, %3, %cst {dimension_numbers = #tpu.dot_dimension_numbers<[1], [0], [0], [1], [0, 0, 1, 1], [], []>} : vector<4x16xbf16>, vector<16x256xbf16>, vector<4x256xf32> -> vector<4x256xf32>
    %c0_5 = arith.constant 0 : index
    %c0_6 = arith.constant 0 : index
    %5 = vector.load %arg4[%c0_5, %c0_6] : memref<4x1xf32, #tpu.memory_space<vmem>>, vector<4x1xf32>
    %6 = vector.broadcast %5 : vector<4x1xf32> to vector<4x256xf32>
    %7 = arith.addf %4, %6 : vector<4x256xf32>
    %cst_7 = arith.constant -2.560000e+02 : f32
    %cst_8 = arith.constant 2.560000e+02 : f32
    %8 = vector.broadcast %cst_7 : f32 to vector<4x256xf32>
    %9 = arith.maximumf %8, %7 : vector<4x256xf32>
    %10 = vector.broadcast %cst_8 : f32 to vector<4x256xf32>
    %11 = arith.minimumf %10, %9 : vector<4x256xf32>
    %c0_9 = arith.constant 0 : index
    %c0_10 = arith.constant 0 : index
    %c0_11 = arith.constant 0 : index
    %12 = vector.load %arg5[%c0_9, %c0_10, %c0_11] : memref<1x4x256xf32, #tpu.memory_space<vmem>>, vector<1x4x256xf32>
    %13 = vector.shape_cast %12 : vector<1x4x256xf32> to vector<4x256xf32>
    %14 = vector.shape_cast %11 : vector<4x256xf32> to vector<1x4x256xf32>
    tpu.vector_store %arg5[%c0_9, %c0_10, %c0_11], %14 {strides = array<i32>} : memref<1x4x256xf32, #tpu.memory_space<vmem>>, vector<1x4x256xf32>,
    return
  }
  func.func @transform_0(%arg0: i32, %arg1: i32) -> (i32, i32, i32) {
    %c0_i32 = arith.constant 0 : i32
    %c0_i32_0 = arith.constant 0 : i32
    return %arg0, %c0_i32, %arg1 : i32, i32, i32
  }
  func.func @transform_1(%arg0: i32, %arg1: i32) -> (i32, i32, i32) {
    %c0_i32 = arith.constant 0 : i32
    %c0_i32_0 = arith.constant 0 : i32
    %c0_i32_1 = arith.constant 0 : i32
    return %arg0, %c0_i32, %c0_i32_0 : i32, i32, i32
  }
  func.func @transform_2(%arg0: i32, %arg1: i32) -> (i32, i32) {
    %c0_i32 = arith.constant 0 : i32
    %c0_i32_0 = arith.constant 0 : i32
    %c0_i32_1 = arith.constant 0 : i32
    return %c0_i32, %c0_i32_0 : i32, i32
  }
  func.func @transform_3(%arg0: i32, %arg1: i32) -> (i32, i32, i32) {
    %c0_i32 = arith.constant 0 : i32
    %c0_i32_0 = arith.constant 0 : i32
    return %arg0, %c0_i32, %arg1 : i32, i32, i32
  }
}

</mosaic_0001>

<llo_original>
// kernel: tpu_custom_call.1
$region0: #{tpu_custom_call.1}
  #allocation0 [shape = 'u32[]', space=smem, size = 0x4, offset = 0x4, fixed_abs, tag = 'smem constant byte address 0x4 - core index']
  #allocation1 [shape = 'u32[144,128]{1,0:T(1,128)}', space=vmem, size = 0x12000, scoped, tag = 'internal scratch']
  %s0 = inlined_call_operand.hbm [shape: bf16[2,16,256], index: 0, kind: input, shape index: {}]
  %s1 = inlined_call_operand.vmem [shape: bf16[2,4,16], index: 1, kind: input, shape index: {}]
  %s2 = inlined_call_operand.vmem [shape: f32[4,1], index: 2, kind: input, shape index: {}]
  %s3 = inlined_call_operand.hbm [shape: f32[2,4,256], index: 3, kind: output, shape index: {}]
  %s4 = sld [smem:[#allocation0]]
  $region49: #{tpu_custom_call.1} parent=0
    _
  %s6 = ssub.s32 1, %s4
  %s7 = scalar_select 0, %s6, %s4
  $region1: #{tpu_custom_call.1} parent=0
    #allocation2 [shape = 'u8[16384]{0}', space=vmem, size = 0x4000, scoped, tag = 'input window, operand 0']
    #allocation3 [shape = 's32[2]{0}', space=sflag, size = 0x8, scoped, tag = 'scoped memory for tpu_custom_call.1']
    #allocation4 [shape = 's32[2]{0}', space=sflag, size = 0x8, scoped, tag = 'scoped memory for tpu_custom_call.1']
    #allocation5 [shape = 'u8[8192]{0}', space=vmem, size = 0x2000, scoped, tag = 'output window, operand 0']
    %8 = vsyncpa [#allocation3], 0
    %s9 = scalar_lea.sflag [#allocation3], 1
    %10 = vsyncpa %s9, 0
    %11 = vsyncpa [#allocation4], 0
    %s12 = scalar_lea.sflag [#allocation4], 1
    %13 = vsyncpa %s12, 0
    loop: start=0, step=1, limit=4
    $region2: #{tpu_custom_call.1} parent=1 // loop_pre_header
      _
    $region3: #{tpu_custom_call.1} parent=1 // loop_header
      %s15 = sphi 0, %s19
      %p16 = scmp.ge.s32.totalorder %s15, 4
      %s22 = sphi 0, %s34
      %s23 = sphi 0, %s30
      %s24 = sphi 0, %s22
      %s25 = sphi 0, %s23
      %s26 = sphi 0, %s24
      %s27 = sphi 0, %s25
      %s39 = sphi 0, %s41
      %s42 = sphi 0, %s39
      %s43 = sphi 0, %s42
      %s59 = sphi 0, %s43
      %s65 = sphi 0, %s67
      %s68 = sphi 0, %s65
      %s69 = sphi 0, %s68
      %s85 = sphi 0, %s69
      %s89 = sphi 0, %s89
      %s91 = sphi 0, %s89
      %s92 = sphi 0, %s91
      %s106 = sphi 0, %s92
      %s114 = sphi 0, %s116
      %s117 = sphi 0, %s114
      %s118 = sphi 0, %s117
      %s134 = sphi 0, %s118
    $region4: #{tpu_custom_call.1} parent=1 // loop_header_branch
      %18 = sbr.rel (%p16) target = $region8
    $region5: #{tpu_custom_call.1} parent=1 // loop_body
      %s20 = ssub.s32 %s15, 1
      %s21 = ssub.s32 %s15, 2
      %s28 = sadd.s32 1, %s23
      %p29 = scmp.ge.s32.totalorder %s28, 1
      %s30 = scalar_select %p29, 0, %s28
      %s31 = sadd.s32 1, %s22
      %s32 = scalar_select %p29, %s31, %s22
      %p33 = scmp.ge.s32.totalorder %s32, 2
      %s34 = scalar_select %p33, 0, %s32
      %s35 = ssub.s32 %s22, %s34
      %s36 = ssub.s32 %s23, %s30
      %s37 = sor.u32 %s35, %s36
      %p38 = scmp.eq.s32.totalorder %s37, 0
      %s40 = sadd.s32 %s39, 1
      %s41 = scalar_select %p38, %s39, %s40
      %p44 = pneg %p38
      %p45 = scmp.eq.s32.totalorder %s15, 1
      %p46 = por %p44, %p45
      %p47 = scmp.ne.s32.totalorder %s39, %s42
      %p48 = scmp.eq.s32.totalorder %s15, 0
      %p49 = por %p47, %p48
      %p50 = scmp.ne.s32.totalorder %s39, %s42
      %p51 = scmp.eq.s32.totalorder %s20, 1
      %p52 = por %p50, %p51
      %p53 = scmp.ne.s32.totalorder %s42, %s43
      %p54 = scmp.eq.s32.totalorder %s20, 0
      %p55 = por %p53, %p54
      %p56 = scmp.ne.s32.totalorder %s42, %s43
      %p57 = scmp.eq.s32.totalorder %s21, 1
      %p58 = por %p56, %p57
      %p60 = scmp.ne.s32.totalorder %s43, %s59
      %p61 = scmp.eq.s32.totalorder %s21, 0
      %p62 = por %p60, %p61
      %s63 = ssub.s32 %s22, %s34
      %p64 = scmp.eq.s32.totalorder %s63, 0
      %s66 = sadd.s32 %s65, 1
      %s67 = scalar_select %p64, %s65, %s66
      %p70 = pneg %p64
      %p71 = scmp.eq.s32.totalorder %s15, 1
      %p72 = por %p70, %p71
      %p73 = scmp.ne.s32.totalorder %s65, %s68
      %p74 = scmp.eq.s32.totalorder %s15, 0
      %p75 = por %p73, %p74
      %p76 = scmp.ne.s32.totalorder %s65, %s68
      %p77 = scmp.eq.s32.totalorder %s20, 1
      %p78 = por %p76, %p77
      %p79 = scmp.ne.s32.totalorder %s68, %s69
      %p80 = scmp.eq.s32.totalorder %s20, 0
      %p81 = por %p79, %p80
      %p82 = scmp.ne.s32.totalorder %s68, %s69
      %p83 = scmp.eq.s32.totalorder %s21, 1
      %p84 = por %p82, %p83
      %p86 = scmp.ne.s32.totalorder %s69, %s85
      %p87 = scmp.eq.s32.totalorder %s21, 0
      %p88 = por %p86, %p87
      %s90 = sadd.s32 %s89, 1
      %p93 = scmp.eq.s32.totalorder %s15, 1
      %p94 = scmp.ne.s32.totalorder %s89, %s91
      %p95 = scmp.eq.s32.totalorder %s15, 0
      %p96 = por %p94, %p95
      %p97 = scmp.ne.s32.totalorder %s89, %s91
      %p98 = scmp.eq.s32.totalorder %s20, 1
      %p99 = por %p97, %p98
      %p100 = scmp.ne.s32.totalorder %s91, %s92
      %p101 = scmp.eq.s32.totalorder %s20, 0
      %p102 = por %p100, %p101
      %p103 = scmp.ne.s32.totalorder %s91, %s92
      %p104 = scmp.eq.s32.totalorder %s21, 1
      %p105 = por %p103, %p104
      %p107 = scmp.ne.s32.totalorder %s92, %s106
      %p108 = scmp.eq.s32.totalorder %s21, 0
      %p109 = por %p107, %p108
      %s110 = ssub.s32 %s22, %s34
      %s111 = ssub.s32 %s23, %s30
      %s112 = sor.u32 %s110, %s111
      %p113 = scmp.eq.s32.totalorder %s112, 0
      %s115 = sadd.s32 %s114, 1
      %s116 = scalar_select %p113, %s114, %s115
      %p119 = pneg %p113
      %p120 = scmp.eq.s32.totalorder %s15, 1
      %p121 = por %p119, %p120
      %p122 = scmp.ne.s32.totalorder %s114, %s117
      %p123 = scmp.eq.s32.totalorder %s15, 0
      %p124 = por %p122, %p123
      %p125 = scmp.ne.s32.totalorder %s114, %s117
      %p126 = scmp.eq.s32.totalorder %s20, 1
      %p127 = por %p125, %p126
      %p128 = scmp.ne.s32.totalorder %s117, %s118
      %p129 = scmp.eq.s32.totalorder %s20, 0
      %p130 = por %p128, %p129
      %p131 = scmp.ne.s32.totalorder %s117, %s118
      %p132 = scmp.eq.s32.totalorder %s21, 1
      %p133 = por %p131, %p132
      %p135 = scmp.ne.s32.totalorder %s118, %s134
      %p136 = scmp.eq.s32.totalorder %s21, 0
      %p137 = por %p135, %p136
      %p138 = scmp.le.s32.totalorder 1, %s15
      %p139 = scmp.lt.s32.totalorder %s15, 3
      %p140 = pnand %p138, %p139
      %p141 = pneg %p140
      // Predicated region
      $region9: #{tpu_custom_call.1} parent=5 // pred_check
        _
      $region10: #{tpu_custom_call.1} parent=5 // pred_check_branch
        %143 = sbr.rel (%p140) target = $region12
      $region11: #{tpu_custom_call.1} parent=5 // pred_region
        %s144 = ssub.s32 %s15, 1
        // Predicated region
        $region13: #{tpu_custom_call.1} parent=11 // pred_check
          %p145 = pneg %p102
        $region14: #{tpu_custom_call.1} parent=11 // pred_check_branch
          %147 = sbr.rel (%p145) target = $region16
        $region15: #{tpu_custom_call.1} parent=11 // pred_region
          _
        $region16: #{tpu_custom_call.1} parent=11 // pred_fallthru
          _
      $region12: #{tpu_custom_call.1} parent=5 // pred_fallthru
        _
      %p148 = scmp.lt.s32.totalorder %s15, 2
      // Predicated region
      $region17: #{tpu_custom_call.1} parent=5 // pred_check
        %p149 = pneg %p148
      $region18: #{tpu_custom_call.1} parent=5 // pred_check_branch
        %151 = sbr.rel (%p149) target = $region20
      $region19: #{tpu_custom_call.1} parent=5 // pred_region
        // Predicated region
        $region21: #{tpu_custom_call.1} parent=19 // pred_check
          %p152 = pneg %p49
        $region22: #{tpu_custom_call.1} parent=19 // pred_check_branch
          %154 = sbr.rel (%p152) target = $region24
        $region23: #{tpu_custom_call.1} parent=19 // pred_region
          %s155 = sand.u32 %s39, 1
          %s156 = scalar_lea.sflag [#allocation3], %s155
          %s157 = sand.u32 %s39, 1
          %s158 = smul.addr %s157, 16
          %s159 = scalar_lea.vmem [#allocation2], %s158
          %s160 = smul.u32 2, %s23
          %s162 = ssub.s32 256, 256
          %163 = vsyncadd %s156, %s162
          %s164 = smul.addr %s22, 4
          %s165 = sadd.s32 %s160, %s164
          %s166 = smul.addr %s165, 64
          %s167 = scalar_lea.hbm %s0, %s166
          %s168 = sshll.u32 %s159, 4
          %s169 = int_to_ptr.vmem [resolvable:$true] %s168
          %174 = dma.hbm_to_vmem [thread:$0]  %s167, 256, %s169, %s156, 128, 128, 8
        $region24: #{tpu_custom_call.1} parent=19 // pred_fallthru
          _
        // Predicated region
        $region25: #{tpu_custom_call.1} parent=19 // pred_check
          %p175 = pneg %p75
        $region26: #{tpu_custom_call.1} parent=19 // pred_check_branch
          %177 = sbr.rel (%p175) target = $region28
        $region27: #{tpu_custom_call.1} parent=19 // pred_region
          %p178 = scmp.lt.s32.totalorder %s22, 1
          %s179 = scalar_select %p178, %s22, 1
          %s180 = smul.addr %s179, 2
          %s181 = scalar_lea.vmem %s1, %s180
        $region28: #{tpu_custom_call.1} parent=19 // pred_fallthru
          _
      $region20: #{tpu_custom_call.1} parent=5 // pred_fallthru
        _
      %p182 = scmp.le.s32.totalorder 1, %s15
      %p183 = scmp.lt.s32.totalorder %s15, 3
      %p184 = pnand %p182, %p183
      %p185 = pneg %p184
      // Predicated region
      $region29: #{tpu_custom_call.1} parent=5 // pred_check
        _
      $region30: #{tpu_custom_call.1} parent=5 // pred_check_branch
        %187 = sbr.rel (%p184) target = $region32
      $region31: #{tpu_custom_call.1} parent=5 // pred_region
        %s188 = ssub.s32 %s15, 1
        %s189 = sand.u32 %s42, 1
        %s190 = scalar_lea.sflag [#allocation3], %s189
        %s191 = sand.u32 %s42, 1
        %s192 = smul.addr %s191, 16
        %s193 = scalar_lea.vmem [#allocation2], %s192
        // Predicated region
        $region33: #{tpu_custom_call.1} parent=31 // pred_check
          %p194 = pneg %p55
        $region34: #{tpu_custom_call.1} parent=31 // pred_check_branch
          %196 = sbr.rel (%p194) target = $region36
        $region35: #{tpu_custom_call.1} parent=31 // pred_region
          %197 = dma.done %s190, 256
        $region36: #{tpu_custom_call.1} parent=31 // pred_fallthru
          _
        %s198 = sand.u32 %s42, 1
        %s199 = scalar_lea.sflag [#allocation3], %s198
        %s200 = sand.u32 %s42, 1
        %s201 = smul.addr %s200, 16
        %s202 = scalar_lea.vmem [#allocation2], %s201
        %p203 = pneg %p55
        %p204 = pneg %p52
        %p205 = scmp.lt.s32.totalorder %s24, 1
        %s206 = scalar_select %p205, %s24, 1
        %s207 = smul.addr %s206, 2
        %s208 = scalar_lea.vmem %s1, %s207
        %p209 = pneg %p81
        %p210 = pneg %p78
        %p211 = pneg %p102
        %p212 = pneg %p99
        %p213 = pneg %p130
        %p214 = pneg %p127
        %s215 = sand.u32 %s117, 1
        %s216 = scalar_lea.sflag [#allocation4], %s215
        %s217 = sand.u32 %s117, 1
        %s218 = smul.addr %s217, 8
        %s219 = scalar_lea.vmem [#allocation5], %s218
        %s220 = smul.u32 2, %s25
        %p221 = scmp.lt.s32.totalorder %s24, 1
        %s222 = scalar_select %p221, %s24, 1
        %s223 = smul.addr %s222, 2
        %s224 = scalar_lea.vmem %s1, %s223
        %s225 = smul.u32 2, %s25
        %v227 = vld [vmem:[%s224] sm:$0x3]
        %v228 = vld [vmem:[%s193] sm:$0xff]
        %v229 = vld [vmem:[%s193 + $0x8] sm:$0xff]
        %v230 = vld [vmem:[%s2] sm:$0xf]
        %232 = vset.pattern.permute.xlu0 0
        %233 = vperm.xlu0 %232, %v230
        %v234 = vpop.permute.xlu0 %233
        %v238 = vunpack.c.l.b16 %v228
        %v239 = vunpack.c.h.b16 %v228
        %v240 = vunpack.c.l.b16 %v229
        %v241 = vunpack.c.h.b16 %v229
        %v242 = vpack.c.b16 %v240, %v238
        %v243 = vpack.c.b16 %v241, %v239
        %vm246 = vcmask 130048
        %v248 = vsel %vm246, %v227, 0
        %250 = vmatprep.subr.bf16.mxu0 0
        %251 = vmatpush1.bf16.msra.mxu0 0
        %252 = vmatprep.subr.bf16.mxu0 0
        %253 = vmatpush1.bf16.msra.mxu0 0
        %254 = vmatprep.subr.bf16.mxu0 0
        %255 = vmatpush1.bf16.msra.mxu0 0
        %256 = vmatprep.subr.bf16.mxu0 0
        %257 = vmatpush1.bf16.msra.mxu0 0
        %258 = vmatprep.subr.bf16.mxu0 0
        %259 = vmatpush1.bf16.msra.mxu0 0
        %260 = vmatprep.subr.bf16.mxu0 0
        %261 = vmatpush1.bf16.msra.mxu0 0
        %262 = vmatprep.subr.bf16.mxu0 0
        %263 = vmatpush1.bf16.msra.mxu0 0
        %264 = vmatprep.subr.bf16.mxu0 %v243
        %265 = vmatpush1.bf16.msra.mxu0 %v242
        %266 = vmatprep.subr.bf16.mxu0 0
        %267 = vmatpush2.bf16.msra.mxu0 0
        %268 = vmatprep.subr.bf16.mxu0 0
        %269 = vmatpush2.bf16.msra.mxu0 0
        %270 = vmatprep.subr.bf16.mxu0 0
        %271 = vmatpush2.bf16.msra.mxu0 0
        %272 = vmatprep.subr.bf16.mxu0 0
        %273 = vmatpush2.bf16.msra.mxu0 0
        %274 = vmatprep.subr.bf16.mxu0 0
        %275 = vmatpush2.bf16.msra.mxu0 0
        %276 = vmatprep.subr.bf16.mxu0 0
        %277 = vmatpush2.bf16.msra.mxu0 0
        %278 = vmatprep.subr.bf16.mxu0 0
        %279 = vmatpush2.bf16.msra.mxu0 0
        %280 = vmatprep.subr.bf16.mxu0 0
        %281 = vmatpush2.bf16.msra.mxu0 0
        %282 = vmatprep.mubr.bf16.mxu0 0
        %283 = vmatmul.mubr.bf16.gmra.mxu0 %v248
        %v284 = vpop.f32.mrf.mxu0
        %v285 = vadd.f32 %v234, %v284
        %v286 = vpop.f32.mrf.mxu0
        %v287 = vadd.f32 %v234, %v286
        %v288 = vpop.f32.mrf.mxu0
        %v289 = vpop.f32.mrf.mxu0
        %290 = vdwg.mxu0
        %v291 = vmax.f32 %v285, -256.0
        %v292 = vmax.f32 %v287, -256.0
        %v293 = vmin.f32 %v291, 256.0
        %v294 = vmin.f32 %v292, 256.0
        %v297 = vcombine.low %v293, %v294
        %299 = vst [vmem:[%s219] sm:$0xff] %v297
        %s300 = sand.u32 %s117, 1
        %s301 = scalar_lea.sflag [#allocation4], %s300
        %s302 = sand.u32 %s117, 1
        %s303 = smul.addr %s302, 8
        %s304 = scalar_lea.vmem [#allocation5], %s303
        // Predicated region
        $region37: #{tpu_custom_call.1} parent=31 // pred_check
          %p305 = pneg %p127
        $region38: #{tpu_custom_call.1} parent=31 // pred_check_branch
          %307 = sbr.rel (%p305) target = $region40
        $region39: #{tpu_custom_call.1} parent=31 // pred_region
          %s308 = smul.u32 2, %s25
          %s310 = ssub.s32 128, 128
          %311 = vsyncadd %s301, %s310
          %s312 = smul.addr %s24, 2
          %s313 = sadd.s32 %s308, %s312
          %s314 = smul.addr %s313, 64
          %s315 = scalar_lea.hbm %s3, %s314
          %s317 = sshll.u32 %s304, 4
          %s318 = int_to_ptr.vmem [resolvable:$true] %s317
          %320 = dma.vmem_to_hbm [thread:$0]  %s318, 128, %s315, %s301
        $region40: #{tpu_custom_call.1} parent=31 // pred_fallthru
          _
      $region32: #{tpu_custom_call.1} parent=5 // pred_fallthru
        _
      %p321 = scmp.le.s32.totalorder 2, %s15
      // Predicated region
      $region41: #{tpu_custom_call.1} parent=5 // pred_check
        %p322 = pneg %p321
      $region42: #{tpu_custom_call.1} parent=5 // pred_check_branch
        %324 = sbr.rel (%p322) target = $region44
      $region43: #{tpu_custom_call.1} parent=5 // pred_region
        %s325 = ssub.s32 %s15, 2
        // Predicated region
        $region45: #{tpu_custom_call.1} parent=43 // pred_check
          %p326 = pneg %p133
        $region46: #{tpu_custom_call.1} parent=43 // pred_check_branch
          %328 = sbr.rel (%p326) target = $region48
        $region47: #{tpu_custom_call.1} parent=43 // pred_region
          %s329 = sand.u32 %s118, 1
          %s330 = scalar_lea.sflag [#allocation4], %s329
          %s331 = sand.u32 %s118, 1
          %s332 = smul.addr %s331, 8
          %s333 = scalar_lea.vmem [#allocation5], %s332
          %334 = dma.done %s330, 128
        $region48: #{tpu_custom_call.1} parent=43 // pred_fallthru
          _
      $region44: #{tpu_custom_call.1} parent=5 // pred_fallthru
        _
    $region6: #{tpu_custom_call.1} parent=1 // loop_footer
      %s19 = sadd.s32 1, %s15
    $region7: #{tpu_custom_call.1} parent=1 // loop_footer_branch
      %14 = sbr.rel target = $region3
    $region8: #{tpu_custom_call.1} parent=1 // loop_exit
      _
    %335 = vsyncpa [#allocation3], 1
    %s336 = scalar_lea.sflag [#allocation3], 1
    %337 = vsyncpa %s336, 1
    %338 = vsyncpa [#allocation4], 1
    %s339 = scalar_lea.sflag [#allocation4], 1
    %340 = vsyncpa %s339, 1

</llo_original>
